<compile_context>
chip_gen: v7x
topology: tpu7x:2x2x1
jax: 0.10.0
libtpu: 0.0.40
codegen_flags: <defaults>
</compile_context>

<pallas_src>
from functools import partial

import numpy as np
import jax
import jax.numpy as jnp
from jax.experimental import pallas as pl
from jax.experimental.pallas import tpu as pltpu
from jax.scipy.linalg import block_diag

# ---------------- small, module-consistent shapes ----------------
V = 3                        # Nviews
N = 256                      # Nsamples
K = 32                       # args.voxel_embed_dim (latent size)
H_IMG, W_IMG = 16, 16        # args.view_resolution = "16x16"  (self.H, self.W)
HF, WF = H_IMG // 2, W_IMG // 2   # feature volume spatial dims [V, K, H/2, W/2]
HW = HF * WF                 # 64
VHW = V * HW                 # 192  (fused pixel axis)
VK = V * K                   # 96   (fused feature axis)
assert HF == WF              # TODO(synk): non-square feature grid needs per-row clip bounds


def _encoder_kernel(xyz1_ref, proj_ref, ecol_ref, featlog_ref, out_ref):
    """All operands in samples-last (lane-dense) layout.
       xyz1:    [4, TN]      homogeneous points, transposed
       proj:    [16, 4]      rows 0-7 numerators [u*V, w*V, 1.5, 0] (grid scale folded),
                             rows 8-15 denominators [z*V, z*V, 1, 1]
       ecol:    [2*VHW, 8]   [[E 0 -px 0],[0 E -py 0]] pixel-column expansion with the
                             per-pixel coordinate subtraction folded in (col 6 * exact 1)
       featlog: [2*VK, VHW]  blockdiag(feat_v^T) stacked on blockdiag((feat_v@W + b)^T)
       out:     [K, TN]"""
    xyz1 = xyz1_ref[...]                                                      # [4, TN]

    # fused pinhole projection for all views: one small matmul, tile-aligned 8-row slices
    cam = jnp.dot(proj_ref[...], xyz1, preferred_element_type=jnp.float32)    # [16, TN]
    # grid_sample(bilinear, border, align_corners=False) source coords, clipped to border.
    # Row 6 stays exactly 1.0 (1.5/1 - 0.5) and feeds the folded pixel-offset column;
    # row 7 is a don't-care (multiplied by a zero column of ecol).
    coords = jnp.clip(cam[0:8] / cam[8:16] - 0.5, 0.0, WF - 1.0)              # [8, TN]

    # broadcast each view's (x, y) over its HW pixel columns and subtract pixel coords
    d = jnp.dot(ecol_ref[...], coords, preferred_element_type=jnp.float32)    # [2*VHW, TN]
    tent = jnp.maximum(1.0 - jnp.abs(d), 0.0)                                 # separable tents
    wmat = tent[0:VHW] * tent[VHW:2 * VHW]                                    # [VHW, TN] bilinear

    # fused sampling + attention logits: ONE matmul produces both
    sl = jnp.dot(featlog_ref[...], wmat, preferred_element_type=jnp.float32)  # [2*VK, TN]
    sampled = [sl[v * K:(v + 1) * K] for v in range(V)]                       # per-view [K, TN]
    logits = [sl[VK + v * K:VK + (v + 1) * K] for v in range(V)]

    # AttSets: softmax over views with per-channel max (underflow safe), weighted sum
    m = logits[0]
    for lv in logits[1:]:
        m = jnp.maximum(m, lv)
    e0 = jnp.exp(logits[0] - m)
    num = e0 * sampled[0]
    den = e0
    for v in range(1, V):
        ev = jnp.exp(logits[v] - m)
        num = num + ev * sampled[v]
        den = den + ev
    out_ref[...] = num / den                                                   # exact divide


def _build_ecol():
    E = np.kron(np.eye(V, dtype=np.float32), np.ones((HW, 1), np.float32))    # [VHW, V]
    p = np.arange(VHW) % HW
    px = (p % WF).astype(np.float32)[:, None]
    py = (p // WF).astype(np.float32)[:, None]
    z3 = np.zeros((VHW, V), np.float32)
    z1 = np.zeros((VHW, 1), np.float32)
    top = np.concatenate([E, z3, -px, z1], axis=1)                            # x tents
    bot = np.concatenate([z3, E, -py, z1], axis=1)                            # y tents
    return np.concatenate([top, bot], axis=0)                                 # [2*VHW, 8]


_ECOL = _build_ecol()


@partial(jax.jit, static_argnames=("tn",))
def _encode(sampled_xyz, features_nchw, intrinsics, extrinsics, att_w, att_b, *, tn):
    n = sampled_xyz.shape[0]
    assert n % tn == 0

    # --- projection operand: per-view pinhole, feature-grid scale folded in ---
    P = jnp.einsum('vij,vjk->vik', intrinsics, extrinsics[:, :3, :4]).astype(jnp.float32)  # [V,3,4]
    u_rows = P[:, 0, :] * (WF / W_IMG)
    w_rows = P[:, 1, :] * (HF / H_IMG)
    z_rows = P[:, 2, :]
    one = jnp.array([[0.0, 0.0, 0.0, 1.0]], jnp.float32)
    proj = jnp.concatenate([u_rows, w_rows, 1.5 * one, 0.0 * one,   # numerators   [8,4]
                            z_rows, z_rows, one, one], axis=0)      # denominators [8,4]

    # --- transposed homogeneous points (samples on the 128-lane axis) ---
    xyz1 = jnp.concatenate([sampled_xyz.T.astype(jnp.float32),
                            jnp.ones((1, n), jnp.float32)], axis=0)            # [4, n]

    # --- fused feature / logit operand ---
    featT = features_nchw.reshape(V, K, HW).astype(jnp.float32)                # feat_v^T [V,K,HW]
    flogT = jnp.einsum('kc,vkp->vcp', att_w.astype(jnp.float32), featT)        # (feat_v@W)^T
    # bilinear weights sum to 1 per view -> the Linear bias folds in exactly
    flogT = flogT + att_b.astype(jnp.float32).reshape(-1)[None, :, None]
    featbdT = block_diag(*[featT[v] for v in range(V)])                        # [VK, VHW]
    flogbdT = block_diag(*[flogT[v] for v in range(V)])
    featlog = jnp.concatenate([featbdT, flogbdT], axis=0)                      # [2*VK, VHW]

    ecol = jnp.asarray(_ECOL)

    grid_spec = pltpu.PrefetchScalarGridSpec(
        num_scalar_prefetch=0,
        grid=(n // tn,),
        in_specs=[
            pl.BlockSpec((4, tn), lambda i: (0, i)),
            pl.BlockSpec((16, 4), lambda i: (0, 0)),
            pl.BlockSpec((2 * VHW, 2 * V + 2), lambda i: (0, 0)),
            pl.BlockSpec((2 * VK, VHW), lambda i: (0, 0)),
        ],
        out_specs=pl.BlockSpec((K, tn), lambda i: (0, i)),
    )
    out_t = pl.pallas_call(
        _encoder_kernel,
        out_shape=jax.ShapeDtypeStruct((K, n), jnp.float32),
        grid_spec=grid_spec,
        compiler_params=pltpu.CompilerParams(dimension_semantics=("parallel",)),
    )(xyz1, proj, ecol, featlog)
    return out_t.T                                                             # [n, K]


def _pick_tile(n):
    """Lane-tile size: one grid step on single-TensorCore chips (v5e/v6e), two
    'parallel' tiles on dual-TensorCore chips (v7x and newer)."""
    single_tc = False
    try:
        kind = jax.devices()[0].device_kind.lower()
        single_tc = any(t in kind for t in ("v5 lite", "v5e", "v5litepod", "v6 lite", "v6e"))
    except Exception:
        pass
    if (not single_tc) and n % 2 == 0 and (n // 2) % 128 == 0:
        return n // 2
    return n


def local_image_encoder_forward(sampled_xyz, sampled_dir, sampled_dis,
                                features_nchw, intrinsics, extrinsics,
                                att_w, att_b):
    """Returns the `inputs` dict produced by LocalImageEncoder.forward."""
    tn = _pick_tile(sampled_xyz.shape[0])
    emb = _encode(sampled_xyz, features_nchw, intrinsics, extrinsics,
                  att_w, att_b, tn=tn)
    return {'pos': sampled_xyz, 'ray': sampled_dir, 'dists': sampled_dis, 'emb': emb}


# ---------------- pure-JAX reference (gather-based grid_sample, with bias) ----------------
def reference_forward(sampled_xyz, features_nchw, intrinsics, extrinsics, att_w, att_b):
    n = sampled_xyz.shape[0]
    P = jnp.einsum('vij,vjk->vik', intrinsics, extrinsics[:, :3, :4])        # [V,3,4]
    xyz1 = jnp.concatenate([sampled_xyz, jnp.ones((n, 1), jnp.float32)], -1)
    cam = jnp.einsum('vij,nj->vni', P, xyz1)                                 # [V,N,3]
    u = cam[..., 0] / cam[..., 2]
    w = cam[..., 1] / cam[..., 2]
    gx = 2.0 * u / W_IMG - 1.0
    gy = 2.0 * w / H_IMG - 1.0
    ix = jnp.clip(((gx + 1.0) * WF - 1.0) * 0.5, 0.0, WF - 1.0)
    iy = jnp.clip(((gy + 1.0) * HF - 1.0) * 0.5, 0.0, HF - 1.0)
    x0 = jnp.floor(ix); y0 = jnp.floor(iy)
    fx = ix - x0;       fy = iy - y0
    x0i = x0.astype(jnp.int32); y0i = y0.astype(jnp.int32)
    x1i = jnp.minimum(x0i + 1, WF - 1); y1i = jnp.minimum(y0i + 1, HF - 1)

    sampled = []
    for v in range(V):
        fv = features_nchw[v]                                                # [K,Hf,Wf]
        s = (fv[:, y0i[v], x0i[v]] * ((1 - fx[v]) * (1 - fy[v]))
             + fv[:, y0i[v], x1i[v]] * (fx[v] * (1 - fy[v]))
             + fv[:, y1i[v], x0i[v]] * ((1 - fx[v]) * fy[v])
             + fv[:, y1i[v], x1i[v]] * (fx[v] * fy[v]))                      # [K,N]
        sampled.append(s.T)                                                  # [N,K]
    sampled = jnp.stack(sampled, 0)                                          # [V,N,K]
    logits = sampled @ att_w + att_b
    attn = jax.nn.softmax(logits, axis=0)
    return jnp.sum(attn * sampled, axis=0)                                   # [N,K]


if __name__ == "__main__":
    key = jax.random.PRNGKey(0)
    k1, k2, k3, k4, k5, k6 = jax.random.split(key, 6)

    # sampled ray points placed in front of the cameras so they project in-image
    xy = jax.random.uniform(k1, (N, 2), minval=-0.4, maxval=0.4)
    z = jax.random.uniform(k2, (N, 1), minval=1.5, maxval=2.5)
    sampled_xyz = jnp.concatenate([xy, z], -1).astype(jnp.float32)
    sampled_dir = jax.random.normal(k3, (N, 3), jnp.float32)
    sampled_dir = sampled_dir / jnp.linalg.norm(sampled_dir, axis=-1, keepdims=True)
    sampled_dis = jnp.full((N,), 0.05, jnp.float32)

    # feature volume [Nviews, K, H/2, W/2] (NCHW, as produced by the ResNet)
    features = jax.random.normal(k4, (V, K, HF, WF), jnp.float32)

    # pinhole intrinsics for a 16x16 image, per-view extrinsics (small offsets)
    intr = jnp.array([[16.0, 0.0, 8.0],
                      [0.0, 16.0, 8.0],
                      [0.0, 0.0, 1.0]], jnp.float32)
    intrinsics = jnp.tile(intr[None], (V, 1, 1))
    trans = jnp.array([[0.0, 0.0, 0.0],
                       [0.15, -0.10, 0.10],
                       [-0.10, 0.12, -0.05]], jnp.float32)
    extrinsics = jnp.tile(jnp.eye(4, dtype=jnp.float32)[None], (V, 1, 1))
    extrinsics = extrinsics.at[:, :3, 3].set(trans)

    # deterministic AttSets parameters (Linear(K, K))
    att_w = (jax.random.normal(k5, (K, K), jnp.float32) / np.sqrt(K)).astype(jnp.float32)
    att_b = (0.01 * jax.random.normal(k6, (1, K), jnp.float32)).astype(jnp.float32)

    out = local_image_encoder_forward(sampled_xyz, sampled_dir, sampled_dis,
                                      features, intrinsics, extrinsics,
                                      att_w, att_b)
    emb = jax.block_until_ready(out['emb'])

    ref = reference_forward(sampled_xyz, features, intrinsics, extrinsics, att_w, att_b)
    np.testing.assert_allclose(np.asarray(emb), np.asarray(ref), rtol=1e-4, atol=1e-4)
    print("KERNEL_OK")
</pallas_src>

<mosaic_0001>
module attributes {stable_mosaic.version = 11 : i64} {
  func.func @_encoder_kernel(%arg0: i32, %arg1: memref<4x128xf32, #tpu.memory_space<vmem>>, %arg2: memref<16x4xf32, #tpu.memory_space<vmem>>, %arg3: memref<384x8xf32, #tpu.memory_space<vmem>>, %arg4: memref<192x192xf32, #tpu.memory_space<vmem>>, %arg5: memref<32x128xf32, #tpu.memory_space<vmem>>) attributes {dimension_semantics = [#tpu.dimension_semantics<parallel>], iteration_bounds = array<i64: 2>, scalar_prefetch = 0 : i64, scratch_operands = 0 : i64, tpu.core_type = #tpu.core_type<tc>, window_params = [{transform_indices = @transform_0, window_bounds = array<i64: 4, 128>}, {pipeline_mode = #tpu.pipeline_mode<synchronous>, transform_indices = @transform_1, window_bounds = array<i64: 16, 4>}, {pipeline_mode = #tpu.pipeline_mode<synchronous>, transform_indices = @transform_2, window_bounds = array<i64: 384, 8>}, {pipeline_mode = #tpu.pipeline_mode<synchronous>, transform_indices = @transform_3, window_bounds = array<i64: 192, 192>}, {transform_indices = @transform_4, window_bounds = array<i64: 32, 128>}]} {
    %c0 = arith.constant 0 : index
    %c0_0 = arith.constant 0 : index
    %0 = vector.load %arg1[%c0, %c0_0] : memref<4x128xf32, #tpu.memory_space<vmem>>, vector<4x128xf32>
    %c0_1 = arith.constant 0 : index
    %c0_2 = arith.constant 0 : index
    %1 = vector.load %arg2[%c0_1, %c0_2] : memref<16x4xf32, #tpu.memory_space<vmem>>, vector<16x4xf32>
    %cst = arith.constant dense<0.000000e+00> : vector<16x128xf32>
    %2 = tpu.matmul %1, %0, %cst {dimension_numbers = #tpu.dot_dimension_numbers<[1], [0], [0], [1], [0, 0, 1, 1], [], []>} : vector<16x4xf32>, vector<4x128xf32>, vector<16x128xf32> -> vector<16x128xf32>
    %3 = vector.extract_strided_slice %2 {offsets = [0, 0], sizes = [8, 128], strides = [1, 1]} : vector<16x128xf32> to vector<8x128xf32>
    %4 = vector.extract_strided_slice %2 {offsets = [8, 0], sizes = [8, 128], strides = [1, 1]} : vector<16x128xf32> to vector<8x128xf32>
    %5 = arith.divf %3, %4 : vector<8x128xf32>
    %cst_3 = arith.constant 5.000000e-01 : f32
    %6 = vector.broadcast %cst_3 : f32 to vector<8x128xf32>
    %7 = arith.subf %5, %6 : vector<8x128xf32>
    %cst_4 = arith.constant 0.000000e+00 : f32
    %cst_5 = arith.constant 7.000000e+00 : f32
    %8 = vector.broadcast %cst_4 : f32 to vector<8x128xf32>
    %9 = arith.maximumf %8, %7 : vector<8x128xf32>
    %10 = vector.broadcast %cst_5 : f32 to vector<8x128xf32>
    %11 = arith.minimumf %10, %9 : vector<8x128xf32>
    %c0_6 = arith.constant 0 : index
    %c0_7 = arith.constant 0 : index
    %12 = vector.load %arg3[%c0_6, %c0_7] : memref<384x8xf32, #tpu.memory_space<vmem>>, vector<384x8xf32>
    %cst_8 = arith.constant dense<0.000000e+00> : vector<384x128xf32>
    %13 = tpu.matmul %12, %11, %cst_8 {dimension_numbers = #tpu.dot_dimension_numbers<[1], [0], [0], [1], [0, 0, 1, 1], [], []>} : vector<384x8xf32>, vector<8x128xf32>, vector<384x128xf32> -> vector<384x128xf32>
    %14 = math.absf %13 : vector<384x128xf32>
    %cst_9 = arith.constant 1.000000e+00 : f32
    %15 = vector.broadcast %cst_9 : f32 to vector<384x128xf32>
    %16 = arith.subf %15, %14 : vector<384x128xf32>
    %cst_10 = arith.constant 0.000000e+00 : f32
    %17 = vector.broadcast %cst_10 : f32 to vector<384x128xf32>
    %18 = arith.maximumf %16, %17 : vector<384x128xf32>
    %19 = vector.extract_strided_slice %18 {offsets = [0, 0], sizes = [192, 128], strides = [1, 1]} : vector<384x128xf32> to vector<192x128xf32>
    %20 = vector.extract_strided_slice %18 {offsets = [192, 0], sizes = [192, 128], strides = [1, 1]} : vector<384x128xf32> to vector<192x128xf32>
    %21 = arith.mulf %19, %20 : vector<192x128xf32>
    %c0_11 = arith.constant 0 : index
    %c0_12 = arith.constant 0 : index
    %22 = vector.load %arg4[%c0_11, %c0_12] : memref<192x192xf32, #tpu.memory_space<vmem>>, vector<192x192xf32>
    %cst_13 = arith.constant dense<0.000000e+00> : vector<192x128xf32>
    %23 = tpu.matmul %22, %21, %cst_13 {dimension_numbers = #tpu.dot_dimension_numbers<[1], [0], [0], [1], [0, 0, 1, 1], [], []>} : vector<192x192xf32>, vector<192x128xf32>, vector<192x128xf32> -> vector<192x128xf32>
    %24 = vector.extract_strided_slice %23 {offsets = [0, 0], sizes = [32, 128], strides = [1, 1]} : vector<192x128xf32> to vector<32x128xf32>
    %25 = vector.extract_strided_slice %23 {offsets = [32, 0], sizes = [32, 128], strides = [1, 1]} : vector<192x128xf32> to vector<32x128xf32>
    %26 = vector.extract_strided_slice %23 {offsets = [64, 0], sizes = [32, 128], strides = [1, 1]} : vector<192x128xf32> to vector<32x128xf32>
    %27 = vector.extract_strided_slice %23 {offsets = [96, 0], sizes = [32, 128], strides = [1, 1]} : vector<192x128xf32> to vector<32x128xf32>
    %28 = vector.extract_strided_slice %23 {offsets = [128, 0], sizes = [32, 128], strides = [1, 1]} : vector<192x128xf32> to vector<32x128xf32>
    %29 = vector.extract_strided_slice %23 {offsets = [160, 0], sizes = [32, 128], strides = [1, 1]} : vector<192x128xf32> to vector<32x128xf32>
    %30 = arith.maximumf %27, %28 : vector<32x128xf32>
    %31 = arith.maximumf %30, %29 : vector<32x128xf32>
    %32 = arith.subf %27, %31 : vector<32x128xf32>
    %33 = math.exp %32 : vector<32x128xf32>
    %34 = arith.mulf %33, %24 : vector<32x128xf32>
    %35 = arith.subf %28, %31 : vector<32x128xf32>
    %36 = math.exp %35 : vector<32x128xf32>
    %37 = arith.mulf %36, %25 : vector<32x128xf32>
    %38 = arith.addf %34, %37 : vector<32x128xf32>
    %39 = arith.addf %33, %36 : vector<32x128xf32>
    %40 = arith.subf %29, %31 : vector<32x128xf32>
    %41 = math.exp %40 : vector<32x128xf32>
    %42 = arith.mulf %41, %26 : vector<32x128xf32>
    %43 = arith.addf %38, %42 : vector<32x128xf32>
    %44 = arith.addf %39, %41 : vector<32x128xf32>
    %45 = arith.divf %43, %44 : vector<32x128xf32>
    %c0_14 = arith.constant 0 : index
    %c0_15 = arith.constant 0 : index
    %46 = vector.load %arg5[%c0_14, %c0_15] : memref<32x128xf32, #tpu.memory_space<vmem>>, vector<32x128xf32>
    tpu.vector_store %arg5[%c0_14, %c0_15], %45 {strides = array<i32>} : memref<32x128xf32, #tpu.memory_space<vmem>>, vector<32x128xf32>,
    return
  }
  func.func @transform_0(%arg0: i32) -> (i32, i32) {
    %c0_i32 = arith.constant 0 : i32
    %c0_i32_0 = arith.constant 0 : i32
    return %c0_i32, %arg0 : i32, i32
  }
  func.func @transform_1(%arg0: i32) -> (i32, i32) {
    %c0_i32 = arith.constant 0 : i32
    %c0_i32_0 = arith.constant 0 : i32
    %c0_i32_1 = arith.constant 0 : i32
    return %c0_i32, %c0_i32_0 : i32, i32
  }
  func.func @transform_2(%arg0: i32) -> (i32, i32) {
    %c0_i32 = arith.constant 0 : i32
    %c0_i32_0 = arith.constant 0 : i32
    %c0_i32_1 = arith.constant 0 : i32
    return %c0_i32, %c0_i32_0 : i32, i32
  }
  func.func @transform_3(%arg0: i32) -> (i32, i32) {
    %c0_i32 = arith.constant 0 : i32
    %c0_i32_0 = arith.constant 0 : i32
    %c0_i32_1 = arith.constant 0 : i32
    return %c0_i32, %c0_i32_0 : i32, i32
  }
  func.func @transform_4(%arg0: i32) -> (i32, i32) {
    %c0_i32 = arith.constant 0 : i32
    %c0_i32_0 = arith.constant 0 : i32
    return %c0_i32, %arg0 : i32, i32
  }
}

</mosaic_0001>

<llo_original>
// kernel: _encode.1
$region0: #{_encode.1}
  #allocation0 [shape = 'u32[]', space=smem, size = 0x4, offset = 0x4, fixed_abs, tag = 'smem constant byte address 0x4 - core index']
  #allocation1 [shape = 'u32[144,128]{1,0:T(1,128)}', space=vmem, size = 0x12000, scoped, tag = 'internal scratch']
  %s0 = inlined_call_operand.vmem [shape: f32[4,256], index: 0, kind: input, shape index: {}]
  %s1 = inlined_call_operand.vmem [shape: f32[16,4], index: 1, kind: input, shape index: {}]
  %s2 = inlined_call_operand.vmem [shape: f32[384,8], index: 2, kind: input, shape index: {}]
  %s3 = inlined_call_operand.vmem [shape: f32[192,192], index: 3, kind: input, shape index: {}]
  %s4 = inlined_call_operand.hbm [shape: f32[32,256], index: 4, kind: output, shape index: {}]
  %s5 = sld [smem:[#allocation0]]
  $region49: #{_encode.1} parent=0
    _
  %s7 = ssub.s32 1, %s5
  %s8 = scalar_select 0, %s7, %s5
  $region1: #{_encode.1} parent=0
    #allocation2 [shape = 'u8[32768]{0}', space=vmem, size = 0x8000, scoped, tag = 'output window, operand 0']
    #allocation3 [shape = 's32[2]{0}', space=sflag, size = 0x8, scoped, tag = 'scoped memory for _encode.1']
    %9 = vsyncpa [#allocation3], 0
    %s10 = scalar_lea.sflag [#allocation3], 1
    %11 = vsyncpa %s10, 0
    loop: start=0, step=1, limit=4
    $region2: #{_encode.1} parent=1 // loop_pre_header
      _
    $region3: #{_encode.1} parent=1 // loop_header
      %s13 = sphi 0, %s17
      %p14 = scmp.ge.s32.totalorder %s13, 4
      %s23 = sphi 0, %s25
      %s26 = sphi 0, %s23
      %s27 = sphi 0, %s26
      %s43 = sphi 0, %s27
      %s47 = sphi 0, %s47
      %s49 = sphi 0, %s47
      %s50 = sphi 0, %s49
      %s64 = sphi 0, %s50
      %s68 = sphi 0, %s68
      %s70 = sphi 0, %s68
      %s71 = sphi 0, %s70
      %s85 = sphi 0, %s71
      %s89 = sphi 0, %s89
      %s91 = sphi 0, %s89
      %s92 = sphi 0, %s91
      %s106 = sphi 0, %s92
      %s112 = sphi 0, %s114
      %s115 = sphi 0, %s112
      %s116 = sphi 0, %s115
      %s132 = sphi 0, %s116
    $region4: #{_encode.1} parent=1 // loop_header_branch
      %16 = sbr.rel (%p14) target = $region8
    $region5: #{_encode.1} parent=1 // loop_body
      %s18 = ssub.s32 %s13, 1
      %s19 = ssub.s32 %s13, 2
      %s20 = sadd.s32 %s13, 1
      %s21 = ssub.s32 %s13, %s20
      %p22 = scmp.eq.s32.totalorder %s21, 0
      %s24 = sadd.s32 %s23, 1
      %s25 = scalar_select %p22, %s23, %s24
      %p28 = pneg %p22
      %p29 = scmp.eq.s32.totalorder %s13, 1
      %p30 = por %p28, %p29
      %p31 = scmp.ne.s32.totalorder %s23, %s26
      %p32 = scmp.eq.s32.totalorder %s13, 0
      %p33 = por %p31, %p32
      %p34 = scmp.ne.s32.totalorder %s23, %s26
      %p35 = scmp.eq.s32.totalorder %s18, 1
      %p36 = por %p34, %p35
      %p37 = scmp.ne.s32.totalorder %s26, %s27
      %p38 = scmp.eq.s32.totalorder %s18, 0
      %p39 = por %p37, %p38
      %p40 = scmp.ne.s32.totalorder %s26, %s27
      %p41 = scmp.eq.s32.totalorder %s19, 1
      %p42 = por %p40, %p41
      %p44 = scmp.ne.s32.totalorder %s27, %s43
      %p45 = scmp.eq.s32.totalorder %s19, 0
      %p46 = por %p44, %p45
      %s48 = sadd.s32 %s47, 1
      %p51 = scmp.eq.s32.totalorder %s13, 1
      %p52 = scmp.ne.s32.totalorder %s47, %s49
      %p53 = scmp.eq.s32.totalorder %s13, 0
      %p54 = por %p52, %p53
      %p55 = scmp.ne.s32.totalorder %s47, %s49
      %p56 = scmp.eq.s32.totalorder %s18, 1
      %p57 = por %p55, %p56
      %p58 = scmp.ne.s32.totalorder %s49, %s50
      %p59 = scmp.eq.s32.totalorder %s18, 0
      %p60 = por %p58, %p59
      %p61 = scmp.ne.s32.totalorder %s49, %s50
      %p62 = scmp.eq.s32.totalorder %s19, 1
      %p63 = por %p61, %p62
      %p65 = scmp.ne.s32.totalorder %s50, %s64
      %p66 = scmp.eq.s32.totalorder %s19, 0
      %p67 = por %p65, %p66
      %s69 = sadd.s32 %s68, 1
      %p72 = scmp.eq.s32.totalorder %s13, 1
      %p73 = scmp.ne.s32.totalorder %s68, %s70
      %p74 = scmp.eq.s32.totalorder %s13, 0
      %p75 = por %p73, %p74
      %p76 = scmp.ne.s32.totalorder %s68, %s70
      %p77 = scmp.eq.s32.totalorder %s18, 1
      %p78 = por %p76, %p77
      %p79 = scmp.ne.s32.totalorder %s70, %s71
      %p80 = scmp.eq.s32.totalorder %s18, 0
      %p81 = por %p79, %p80
      %p82 = scmp.ne.s32.totalorder %s70, %s71
      %p83 = scmp.eq.s32.totalorder %s19, 1
      %p84 = por %p82, %p83
      %p86 = scmp.ne.s32.totalorder %s71, %s85
      %p87 = scmp.eq.s32.totalorder %s19, 0
      %p88 = por %p86, %p87
      %s90 = sadd.s32 %s89, 1
      %p93 = scmp.eq.s32.totalorder %s13, 1
      %p94 = scmp.ne.s32.totalorder %s89, %s91
      %p95 = scmp.eq.s32.totalorder %s13, 0
      %p96 = por %p94, %p95
      %p97 = scmp.ne.s32.totalorder %s89, %s91
      %p98 = scmp.eq.s32.totalorder %s18, 1
      %p99 = por %p97, %p98
      %p100 = scmp.ne.s32.totalorder %s91, %s92
      %p101 = scmp.eq.s32.totalorder %s18, 0
      %p102 = por %p100, %p101
      %p103 = scmp.ne.s32.totalorder %s91, %s92
      %p104 = scmp.eq.s32.totalorder %s19, 1
      %p105 = por %p103, %p104
      %p107 = scmp.ne.s32.totalorder %s92, %s106
      %p108 = scmp.eq.s32.totalorder %s19, 0
      %p109 = por %p107, %p108
      %s110 = ssub.s32 %s13, %s20
      %p111 = scmp.eq.s32.totalorder %s110, 0
      %s113 = sadd.s32 %s112, 1
      %s114 = scalar_select %p111, %s112, %s113
      %p117 = pneg %p111
      %p118 = scmp.eq.s32.totalorder %s13, 1
      %p119 = por %p117, %p118
      %p120 = scmp.ne.s32.totalorder %s112, %s115
      %p121 = scmp.eq.s32.totalorder %s13, 0
      %p122 = por %p120, %p121
      %p123 = scmp.ne.s32.totalorder %s112, %s115
      %p124 = scmp.eq.s32.totalorder %s18, 1
      %p125 = por %p123, %p124
      %p126 = scmp.ne.s32.totalorder %s115, %s116
      %p127 = scmp.eq.s32.totalorder %s18, 0
      %p128 = por %p126, %p127
      %p129 = scmp.ne.s32.totalorder %s115, %s116
      %p130 = scmp.eq.s32.totalorder %s19, 1
      %p131 = por %p129, %p130
      %p133 = scmp.ne.s32.totalorder %s116, %s132
      %p134 = scmp.eq.s32.totalorder %s19, 0
      %p135 = por %p133, %p134
      %p136 = scmp.le.s32.totalorder 1, %s13
      %p137 = scmp.lt.s32.totalorder %s13, 3
      %p138 = pnand %p136, %p137
      %p139 = pneg %p138
      // Predicated region
      $region9: #{_encode.1} parent=5 // pred_check
        _
      $region10: #{_encode.1} parent=5 // pred_check_branch
        %141 = sbr.rel (%p138) target = $region12
      $region11: #{_encode.1} parent=5 // pred_region
        %s142 = ssub.s32 %s13, 1
        // Predicated region
        $region13: #{_encode.1} parent=11 // pred_check
          %p143 = pneg %p60
        $region14: #{_encode.1} parent=11 // pred_check_branch
          %145 = sbr.rel (%p143) target = $region16
        $region15: #{_encode.1} parent=11 // pred_region
          _
        $region16: #{_encode.1} parent=11 // pred_fallthru
          _
        // Predicated region
        $region17: #{_encode.1} parent=11 // pred_check
          %p146 = pneg %p81
        $region18: #{_encode.1} parent=11 // pred_check_branch
          %148 = sbr.rel (%p146) target = $region20
        $region19: #{_encode.1} parent=11 // pred_region
          _
        $region20: #{_encode.1} parent=11 // pred_fallthru
          _
        // Predicated region
        $region21: #{_encode.1} parent=11 // pred_check
          %p149 = pneg %p102
        $region22: #{_encode.1} parent=11 // pred_check_branch
          %151 = sbr.rel (%p149) target = $region24
        $region23: #{_encode.1} parent=11 // pred_region
          _
        $region24: #{_encode.1} parent=11 // pred_fallthru
          _
      $region12: #{_encode.1} parent=5 // pred_fallthru
        _
      %p152 = scmp.lt.s32.totalorder %s13, 2
      // Predicated region
      $region25: #{_encode.1} parent=5 // pred_check
        %p153 = pneg %p152
      $region26: #{_encode.1} parent=5 // pred_check_branch
        %155 = sbr.rel (%p153) target = $region28
      $region27: #{_encode.1} parent=5 // pred_region
        // Predicated region
        $region29: #{_encode.1} parent=27 // pred_check
          %p156 = pneg %p33
        $region30: #{_encode.1} parent=27 // pred_check_branch
          %158 = sbr.rel (%p156) target = $region32
        $region31: #{_encode.1} parent=27 // pred_region
          %p159 = scmp.lt.s32.totalorder %s13, 1
          %s160 = scalar_select %p159, %s13, 1
          %s161 = smul.addr %s160, 4
          %s162 = scalar_lea.vmem %s0, %s161
        $region32: #{_encode.1} parent=27 // pred_fallthru
          _
      $region28: #{_encode.1} parent=5 // pred_fallthru
        _
      %p163 = scmp.le.s32.totalorder 1, %s13
      %p164 = scmp.lt.s32.totalorder %s13, 3
      %p165 = pnand %p163, %p164
      %p166 = pneg %p165
      // Predicated region
      $region33: #{_encode.1} parent=5 // pred_check
        _
      $region34: #{_encode.1} parent=5 // pred_check_branch
        %168 = sbr.rel (%p165) target = $region36
      $region35: #{_encode.1} parent=5 // pred_region
        %s169 = ssub.s32 %s13, 1
        %p170 = scmp.lt.s32.totalorder %s18, 1
        %s171 = scalar_select %p170, %s18, 1
        %s172 = smul.addr %s171, 4
        %s173 = scalar_lea.vmem %s0, %s172
        %p174 = pneg %p39
        %p175 = pneg %p36
        %p176 = pneg %p60
        %p177 = pneg %p57
        %p178 = pneg %p81
        %p179 = pneg %p78
        %p180 = pneg %p102
        %p181 = pneg %p99
        %p182 = pneg %p128
        %p183 = pneg %p125
        %s184 = sand.u32 %s115, 1
        %s185 = scalar_lea.sflag [#allocation3], %s184
        %s186 = sand.u32 %s115, 1
        %s187 = smul.addr %s186, 32
        %s188 = scalar_lea.vmem [#allocation2], %s187
        %p189 = scmp.lt.s32.totalorder %s18, 1
        %s190 = scalar_select %p189, %s18, 1
        %s191 = smul.addr %s190, 4
        %s192 = scalar_lea.vmem %s0, %s191
        %v193 = vld [vmem:[%s192] sm:$0xf]
        %v194 = vld [vmem:[%s1] sm:$0xff]
        %v195 = vld [vmem:[%s1 + $0x8] sm:$0xff]
        %vm196 = vcmask 31744
        %v198 = vsel %vm196, %v194, 0
        %v201 = vsel %vm196, %v195, 0
        %vm203 = vcmask 1043456
        %v205 = vsel %vm203, %v193, 0
        %207 = vmatprep.subr.mxu0 0.0
        %208 = vmatpush1.msra.mxu0 %v205
        %209 = vmatprep.subr.mxu0 0.0
        %210 = vmatpush1.msra.mxu0 0.0
        %211 = vmatprep.subr.mxu0 0.0
        %212 = vmatpush1.msra.mxu0 0.0
        %213 = vmatprep.subr.mxu0 0.0
        %214 = vmatpush1.msra.mxu0 0.0
        %215 = vmatprep.subr.mxu0 0.0
        %216 = vmatpush1.msra.mxu0 0.0
        %217 = vmatprep.subr.mxu0 0.0
        %218 = vmatpush1.msra.mxu0 0.0
        %219 = vmatprep.subr.mxu0 0.0
        %220 = vmatpush1.msra.mxu0 0.0
        %221 = vmatprep.subr.mxu0 0.0
        %222 = vmatpush1.msra.mxu0 0.0
        %223 = vmatprep.subr.mxu0 0.0
        %224 = vmatpush1.msra.mxu0 0.0
        %225 = vmatprep.subr.mxu0 0.0
        %226 = vmatpush1.msra.mxu0 0.0
        %227 = vmatprep.subr.mxu0 0.0
        %228 = vmatpush1.msra.mxu0 0.0
        %229 = vmatprep.subr.mxu0 0.0
        %230 = vmatpush1.msra.mxu0 0.0
        %231 = vmatprep.subr.mxu0 0.0
        %232 = vmatpush1.msra.mxu0 0.0
        %233 = vmatprep.subr.mxu0 0.0
        %234 = vmatpush1.msra.mxu0 0.0
        %235 = vmatprep.subr.mxu0 0.0
        %236 = vmatpush1.msra.mxu0 0.0
        %237 = vmatprep.subr.mxu0 0.0
        %238 = vmatpush1.msra.mxu0 0.0
        %239 = vmatprep.subr.mxu0 0.0
        %240 = vmatpush1.msra.mxu0 0.0
        %241 = vmatprep.subr.mxu0 0.0
        %242 = vmatpush1.msra.mxu0 0.0
        %243 = vmatprep.subr.mxu0 0.0
        %244 = vmatpush1.msra.mxu0 0.0
        %245 = vmatprep.subr.mxu0 0.0
        %246 = vmatpush1.msra.mxu0 0.0
        %247 = vmatprep.subr.mxu0 0.0
        %248 = vmatpush1.msra.mxu0 0.0
        %249 = vmatprep.subr.mxu0 0.0
        %250 = vmatpush1.msra.mxu0 0.0
        %251 = vmatprep.subr.mxu0 0.0
        %252 = vmatpush1.msra.mxu0 0.0
        %253 = vmatprep.subr.mxu0 0.0
        %254 = vmatpush1.msra.mxu0 0.0
        %255 = vmatprep.subr.mxu0 0.0
        %256 = vmatpush1.msra.mxu0 0.0
        %257 = vmatprep.subr.mxu0 0.0
        %258 = vmatpush1.msra.mxu0 0.0
        %259 = vmatprep.subr.mxu0 0.0
        %260 = vmatpush1.msra.mxu0 0.0
        %261 = vmatprep.subr.mxu0 0.0
        %262 = vmatpush1.msra.mxu0 0.0
        %263 = vmatprep.subr.mxu0 0.0
        %264 = vmatpush1.msra.mxu0 0.0
        %265 = vmatprep.subr.mxu0 0.0
        %266 = vmatpush1.msra.mxu0 0.0
        %267 = vmatprep.subr.mxu0 0.0
        %268 = vmatpush1.msra.mxu0 0.0
        %269 = vmatprep.subr.mxu0 0.0
        %270 = vmatpush1.msra.mxu0 0.0
        %271 = vmatprep.mubr.f32.mxu0 0.0
        %272 = vmatmul.mubr.f32.gmra.mrb[0].mxu0 %v198
        %v273 = vpop.f32.mrb[0].mxu0
        %v274 = vadd.f32 0.0, %v273
        %v275 = vpop.f32.mrb[0].mxu0
        %276 = vmatprep.mubr.f32.mxu0 0.0
        %277 = vmatmul.mubr.f32.gmra.mrb[0].mxu0 %v201
        %v278 = vpop.f32.mrb[0].mxu0
        %v279 = vadd.f32 0.0, %v278
        %v280 = vpop.f32.mrb[0].mxu0
        %281 = vdwg.mxu0
        %v282 = vrcp.pop %v279
        %v283 = vmul.f32 %v274, %v282
        %v284 = vsub.f32 %v283, 0.5
        %v285 = vmax.f32 %v284, 0.0
        %v286 = vmin.f32 %v285, 7.0
        %v287 = vld [vmem:[%s2] sm:$0xff]
        %v288 = vld [vmem:[%s2 + $0x8] sm:$0xff]
        %v289 = vld [vmem:[%s2 + $0x10] sm:$0xff]
        %v290 = vld [vmem:[%s2 + $0x18] sm:$0xff]
        %v291 = vld [vmem:[%s2 + $0x20] sm:$0xff]
        %v292 = vld [vmem:[%s2 + $0x28] sm:$0xff]
        %v293 = vld [vmem:[%s2 + $0x30] sm:$0xff]
        %v294 = vld [vmem:[%s2 + $0x38] sm:$0xff]
        %v295 = vld [vmem:[%s2 + $0x40] sm:$0xff]
        %v296 = vld [vmem:[%s2 + $0x48] sm:$0xff]
        %v297 = vld [vmem:[%s2 + $0x50] sm:$0xff]
        %v298 = vld [vmem:[%s2 + $0x58] sm:$0xff]
        %v299 = vld [vmem:[%s2 + $0x60] sm:$0xff]
        %v300 = vld [vmem:[%s2 + $0x68] sm:$0xff]
        %v301 = vld [vmem:[%s2 + $0x70] sm:$0xff]
        %v302 = vld [vmem:[%s2 + $0x78] sm:$0xff]
        %v303 = vld [vmem:[%s2 + $0x80] sm:$0xff]
        %v304 = vld [vmem:[%s2 + $0x88] sm:$0xff]
        %v305 = vld [vmem:[%s2 + $0x90] sm:$0xff]
        %v306 = vld [vmem:[%s2 + $0x98] sm:$0xff]
        %v307 = vld [vmem:[%s2 + $0xa0] sm:$0xff]
        %v308 = vld [vmem:[%s2 + $0xa8] sm:$0xff]
        %v309 = vld [vmem:[%s2 + $0xb0] sm:$0xff]
        %v310 = vld [vmem:[%s2 + $0xb8] sm:$0xff]
        %v311 = vld [vmem:[%s2 + $0xc0] sm:$0xff]
        %v312 = vld [vmem:[%s2 + $0xc8] sm:$0xff]
        %v313 = vld [vmem:[%s2 + $0xd0] sm:$0xff]
        %v314 = vld [vmem:[%s2 + $0xd8] sm:$0xff]
        %v315 = vld [vmem:[%s2 + $0xe0] sm:$0xff]
        %v316 = vld [vmem:[%s2 + $0xe8] sm:$0xff]
        %v317 = vld [vmem:[%s2 + $0xf0] sm:$0xff]
        %v318 = vld [vmem:[%s2 + $0xf8] sm:$0xff]
        %v319 = vld [vmem:[%s2 + $0x100] sm:$0xff]
        %v320 = vld [vmem:[%s2 + $0x108] sm:$0xff]
        %v321 = vld [vmem:[%s2 + $0x110] sm:$0xff]
        %v322 = vld [vmem:[%s2 + $0x118] sm:$0xff]
        %v323 = vld [vmem:[%s2 + $0x120] sm:$0xff]
        %v324 = vld [vmem:[%s2 + $0x128] sm:$0xff]
        %v325 = vld [vmem:[%s2 + $0x130] sm:$0xff]
        %v326 = vld [vmem:[%s2 + $0x138] sm:$0xff]
        %v327 = vld [vmem:[%s2 + $0x140] sm:$0xff]
        %v328 = vld [vmem:[%s2 + $0x148] sm:$0xff]
        %v329 = vld [vmem:[%s2 + $0x150] sm:$0xff]
        %v330 = vld [vmem:[%s2 + $0x158] sm:$0xff]
        %v331 = vld [vmem:[%s2 + $0x160] sm:$0xff]
        %v332 = vld [vmem:[%s2 + $0x168] sm:$0xff]
        %v333 = vld [vmem:[%s2 + $0x170] sm:$0xff]
        %v334 = vld [vmem:[%s2 + $0x178] sm:$0xff]
        %vm335 = vcmask 64512
        %v337 = vsel %vm335, %v287, 0
        %v340 = vsel %vm335, %v288, 0
        %v343 = vsel %vm335, %v289, 0
        %v346 = vsel %vm335, %v290, 0
        %v349 = vsel %vm335, %v291, 0
        %v352 = vsel %vm335, %v292, 0
        %v355 = vsel %vm335, %v293, 0
        %v358 = vsel %vm335, %v294, 0
        %v361 = vsel %vm335, %v295, 0
        %v364 = vsel %vm335, %v296, 0
        %v367 = vsel %vm335, %v297, 0
        %v370 = vsel %vm335, %v298, 0
        %v373 = vsel %vm335, %v299, 0
        %v376 = vsel %vm335, %v300, 0
        %v379 = vsel %vm335, %v301, 0
        %v382 = vsel %vm335, %v302, 0
        %v385 = vsel %vm335, %v303, 0
        %v388 = vsel %vm335, %v304, 0
        %v391 = vsel %vm335, %v305, 0
        %v394 = vsel %vm335, %v306, 0
        %v397 = vsel %vm335, %v307, 0
        %v400 = vsel %vm335, %v308, 0
        %v403 = vsel %vm335, %v309, 0
        %v406 = vsel %vm335, %v310, 0
        %v409 = vsel %vm335, %v311, 0
        %v412 = vsel %vm335, %v312, 0
        %v415 = vsel %vm335, %v313, 0
        %v418 = vsel %vm335, %v314, 0
        %v421 = vsel %vm335, %v315, 0
        %v424 = vsel %vm335, %v316, 0
        %v427 = vsel %vm335, %v317, 0
        %v430 = vsel %vm335, %v318, 0
        %v433 = vsel %vm335, %v319, 0
        %v436 = vsel %vm335, %v320, 0
        %v439 = vsel %vm335, %v321, 0
        %v442 = vsel %vm335, %v322, 0
        %v445 = vsel %vm335, %v323, 0
        %v448 = vsel %vm335, %v324, 0
        %v451 = vsel %vm335, %v325, 0
        %v454 = vsel %vm335, %v326, 0
        %v457 = vsel %vm335, %v327, 0
        %v460 = vsel %vm335, %v328, 0
        %v463 = vsel %vm335, %v329, 0
        %v466 = vsel %vm335, %v330, 0
        %v469 = vsel %vm335, %v331, 0
        %v472 = vsel %vm335, %v332, 0
        %v475 = vsel %vm335, %v333, 0
        %v478 = vsel %vm335, %v334, 0
        %480 = vmatprep.subr.mxu0 0.0
        %481 = vmatpush1.msra.mxu0 %v286
        %482 = vmatprep.subr.mxu0 0.0
        %483 = vmatpush1.msra.mxu0 0.0
        %484 = vmatprep.subr.mxu0 0.0
        %485 = vmatpush1.msra.mxu0 0.0
        %486 = vmatprep.subr.mxu0 0.0
        %487 = vmatpush1.msra.mxu0 0.0
        %488 = vmatprep.subr.mxu0 0.0
        %489 = vmatpush1.msra.mxu0 0.0
        %490 = vmatprep.subr.mxu0 0.0
        %491 = vmatpush1.msra.mxu0 0.0
        %492 = vmatprep.subr.mxu0 0.0
        %493 = vmatpush1.msra.mxu0 0.0
        %494 = vmatprep.subr.mxu0 0.0
        %495 = vmatpush1.msra.mxu0 0.0
        %496 = vmatprep.subr.mxu0 0.0
        %497 = vmatpush1.msra.mxu0 0.0
        %498 = vmatprep.subr.mxu0 0.0
        %499 = vmatpush1.msra.mxu0 0.0
        %500 = vmatprep.subr.mxu0 0.0
        %501 = vmatpush1.msra.mxu0 0.0
        %502 = vmatprep.subr.mxu0 0.0
        %503 = vmatpush1.msra.mxu0 0.0
        %504 = vmatprep.subr.mxu0 0.0
        %505 = vmatpush1.msra.mxu0 0.0
        %506 = vmatprep.subr.mxu0 0.0
        %507 = vmatpush1.msra.mxu0 0.0
        %508 = vmatprep.subr.mxu0 0.0
        %509 = vmatpush1.msra.mxu0 0.0
        %510 = vmatprep.subr.mxu0 0.0
        %511 = vmatpush1.msra.mxu0 0.0
        %512 = vmatprep.subr.mxu0 0.0
        %513 = vmatpush1.msra.mxu0 0.0
        %514 = vmatprep.subr.mxu0 0.0
        %515 = vmatpush1.msra.mxu0 0.0
        %516 = vmatprep.subr.mxu0 0.0
        %517 = vmatpush1.msra.mxu0 0.0
        %518 = vmatprep.subr.mxu0 0.0
        %519 = vmatpush1.msra.mxu0 0.0
        %520 = vmatprep.subr.mxu0 0.0
        %521 = vmatpush1.msra.mxu0 0.0
        %522 = vmatprep.subr.mxu0 0.0
        %523 = vmatpush1.msra.mxu0 0.0
        %524 = vmatprep.subr.mxu0 0.0
        %525 = vmatpush1.msra.mxu0 0.0
        %526 = vmatprep.subr.mxu0 0.0
        %527 = vmatpush1.msra.mxu0 0.0
        %528 = vmatprep.subr.mxu0 0.0
        %529 = vmatpush1.msra.mxu0 0.0
        %530 = vmatprep.subr.mxu0 0.0
        %531 = vmatpush1.msra.mxu0 0.0
        %532 = vmatprep.subr.mxu0 0.0
        %533 = vmatpush1.msra.mxu0 0.0
        %534 = vmatprep.subr.mxu0 0.0
        %535 = vmatpush1.msra.mxu0 0.0
        %536 = vmatprep.subr.mxu0 0.0
        %537 = vmatpush1.msra.mxu0 0.0
        %538 = vmatprep.subr.mxu0 0.0
        %539 = vmatpush1.msra.mxu0 0.0
        %540 = vmatprep.subr.mxu0 0.0
        %541 = vmatpush1.msra.mxu0 0.0
        %542 = vmatprep.subr.mxu0 0.0
        %543 = vmatpush1.msra.mxu0 0.0
        %544 = vmatprep.mubr.f32.mxu0 0.0
        %545 = vmatmul.mubr.f32.gmra.mrb[0].mxu0 %v337
        %v546 = vpop.f32.mrb[0].mxu0
        %v547 = vadd.f32 0.0, %v546
        %v548 = vpop.f32.mrb[0].mxu0
        %549 = vmatprep.mubr.f32.mxu0 0.0
        %550 = vmatmul.mubr.f32.gmra.mrb[0].mxu0 %v340
        %v551 = vpop.f32.mrb[0].mxu0
        %v552 = vadd.f32 0.0, %v551
        %v553 = vpop.f32.mrb[0].mxu0
        %554 = vmatprep.mubr.f32.mxu0 0.0
        %555 = vmatmul.mubr.f32.gmra.mrb[0].mxu0 %v343
        %v556 = vpop.f32.mrb[0].mxu0
        %v557 = vadd.f32 0.0, %v556
        %v558 = vpop.f32.mrb[0].mxu0
        %559 = vmatprep.mubr.f32.mxu0 0.0
        %560 = vmatmul.mubr.f32.gmra.mrb[0].mxu0 %v346
        %v561 = vpop.f32.mrb[0].mxu0
        %v562 = vadd.f32 0.0, %v561
        %v563 = vpop.f32.mrb[0].mxu0
        %564 = vmatprep.mubr.f32.mxu0 0.0
        %565 = vmatmul.mubr.f32.gmra.mrb[0].mxu0 %v349
        %v566 = vpop.f32.mrb[0].mxu0
        %v567 = vadd.f32 0.0, %v566
        %v568 = vpop.f32.mrb[0].mxu0
        %569 = vmatprep.mubr.f32.mxu0 0.0
        %570 = vmatmul.mubr.f32.gmra.mrb[0].mxu0 %v352
        %v571 = vpop.f32.mrb[0].mxu0
        %v572 = vadd.f32 0.0, %v571
        %v573 = vpop.f32.mrb[0].mxu0
        %574 = vmatprep.mubr.f32.mxu0 0.0
        %575 = vmatmul.mubr.f32.gmra.mrb[0].mxu0 %v355
        %v576 = vpop.f32.mrb[0].mxu0
        %v577 = vadd.f32 0.0, %v576
        %v578 = vpop.f32.mrb[0].mxu0
        %579 = vmatprep.mubr.f32.mxu0 0.0
        %580 = vmatmul.mubr.f32.gmra.mrb[0].mxu0 %v358
        %v581 = vpop.f32.mrb[0].mxu0
        %v582 = vadd.f32 0.0, %v581
        %v583 = vpop.f32.mrb[0].mxu0
        %584 = vmatprep.mubr.f32.mxu0 0.0
        %585 = vmatmul.mubr.f32.gmra.mrb[0].mxu0 %v361
        %v586 = vpop.f32.mrb[0].mxu0
        %v587 = vadd.f32 0.0, %v586
        %v588 = vpop.f32.mrb[0].mxu0
        %589 = vmatprep.mubr.f32.mxu0 0.0
        %590 = vmatmul.mubr.f32.gmra.mrb[0].mxu0 %v364
        %v591 = vpop.f32.mrb[0].mxu0
        %v592 = vadd.f32 0.0, %v591
        %v593 = vpop.f32.mrb[0].mxu0
        %594 = vmatprep.mubr.f32.mxu0 0.0
        %595 = vmatmul.mubr.f32.gmra.mrb[0].mxu0 %v367
        %v596 = vpop.f32.mrb[0].mxu0
        %v597 = vadd.f32 0.0, %v596
        %v598 = vpop.f32.mrb[0].mxu0
        %599 = vmatprep.mubr.f32.mxu0 0.0
        %600 = vmatmul.mubr.f32.gmra.mrb[0].mxu0 %v370
        %v601 = vpop.f32.mrb[0].mxu0
        %v602 = vadd.f32 0.0, %v601
        %v603 = vpop.f32.mrb[0].mxu0
        %604 = vmatprep.mubr.f32.mxu0 0.0
        %605 = vmatmul.mubr.f32.gmra.mrb[0].mxu0 %v373
        %v606 = vpop.f32.mrb[0].mxu0
        %v607 = vadd.f32 0.0, %v606
        %v608 = vpop.f32.mrb[0].mxu0
        %609 = vmatprep.mubr.f32.mxu0 0.0
        %610 = vmatmul.mubr.f32.gmra.mrb[0].mxu0 %v376
        %v611 = vpop.f32.mrb[0].mxu0
        %v612 = vadd.f32 0.0, %v611
        %v613 = vpop.f32.mrb[0].mxu0
        %614 = vmatprep.mubr.f32.mxu0 0.0
        %615 = vmatmul.mubr.f32.gmra.mrb[0].mxu0 %v379
        %v616 = vpop.f32.mrb[0].mxu0
        %v617 = vadd.f32 0.0, %v616
        %v618 = vpop.f32.mrb[0].mxu0
        %619 = vmatprep.mubr.f32.mxu0 0.0
        %620 = vmatmul.mubr.f32.gmra.mrb[0].mxu0 %v382
        %v621 = vpop.f32.mrb[0].mxu0
        %v622 = vadd.f32 0.0, %v621
        %v623 = vpop.f32.mrb[0].mxu0
        %624 = vmatprep.mubr.f32.mxu0 0.0
        %625 = vmatmul.mubr.f32.gmra.mrb[0].mxu0 %v385
        %v626 = vpop.f32.mrb[0].mxu0
        %v627 = vadd.f32 0.0, %v626
        %v628 = vpop.f32.mrb[0].mxu0
        %629 = vmatprep.mubr.f32.mxu0 0.0
        %630 = vmatmul.mubr.f32.gmra.mrb[0].mxu0 %v388
        %v631 = vpop.f32.mrb[0].mxu0
        %v632 = vadd.f32 0.0, %v631
        %v633 = vpop.f32.mrb[0].mxu0
        %634 = vmatprep.mubr.f32.mxu0 0.0
        %635 = vmatmul.mubr.f32.gmra.mrb[0].mxu0 %v391
        %v636 = vpop.f32.mrb[0].mxu0
        %v637 = vadd.f32 0.0, %v636
        %v638 = vpop.f32.mrb[0].mxu0
        %639 = vmatprep.mubr.f32.mxu0 0.0
        %640 = vmatmul.mubr.f32.gmra.mrb[0].mxu0 %v394
        %v641 = vpop.f32.mrb[0].mxu0
        %v642 = vadd.f32 0.0, %v641
        %v643 = vpop.f32.mrb[0].mxu0
        %644 = vmatprep.mubr.f32.mxu0 0.0
        %645 = vmatmul.mubr.f32.gmra.mrb[0].mxu0 %v397
        %v646 = vpop.f32.mrb[0].mxu0
        %v647 = vadd.f32 0.0, %v646
        %v648 = vpop.f32.mrb[0].mxu0
        %649 = vmatprep.mubr.f32.mxu0 0.0
        %650 = vmatmul.mubr.f32.gmra.mrb[0].mxu0 %v400
        %v651 = vpop.f32.mrb[0].mxu0
        %v652 = vadd.f32 0.0, %v651
        %v653 = vpop.f32.mrb[0].mxu0
        %654 = vmatprep.mubr.f32.mxu0 0.0
        %655 = vmatmul.mubr.f32.gmra.mrb[0].mxu0 %v403
        %v656 = vpop.f32.mrb[0].mxu0
        %v657 = vadd.f32 0.0, %v656
        %v658 = vpop.f32.mrb[0].mxu0
        %659 = vmatprep.mubr.f32.mxu0 0.0
        %660 = vmatmul.mubr.f32.gmra.mrb[0].mxu0 %v406
        %v661 = vpop.f32.mrb[0].mxu0
        %v662 = vadd.f32 0.0, %v661
        %v663 = vpop.f32.mrb[0].mxu0
        %664 = vmatprep.mubr.f32.mxu0 0.0
        %665 = vmatmul.mubr.f32.gmra.mrb[0].mxu0 %v409
        %v666 = vpop.f32.mrb[0].mxu0
        %v667 = vadd.f32 0.0, %v666
        %v668 = vpop.f32.mrb[0].mxu0
        %669 = vmatprep.mubr.f32.mxu0 0.0
        %670 = vmatmul.mubr.f32.gmra.mrb[0].mxu0 %v412
        %v671 = vpop.f32.mrb[0].mxu0
        %v672 = vadd.f32 0.0, %v671
        %v673 = vpop.f32.mrb[0].mxu0
        %674 = vmatprep.mubr.f32.mxu0 0.0
        %675 = vmatmul.mubr.f32.gmra.mrb[0].mxu0 %v415
        %v676 = vpop.f32.mrb[0].mxu0
        %v677 = vadd.f32 0.0, %v676
        %v678 = vpop.f32.mrb[0].mxu0
        %679 = vmatprep.mubr.f32.mxu0 0.0
        %680 = vmatmul.mubr.f32.gmra.mrb[0].mxu0 %v418
        %v681 = vpop.f32.mrb[0].mxu0
        %v682 = vadd.f32 0.0, %v681
        %v683 = vpop.f32.mrb[0].mxu0
        %684 = vmatprep.mubr.f32.mxu0 0.0
        %685 = vmatmul.mubr.f32.gmra.mrb[0].mxu0 %v421
        %v686 = vpop.f32.mrb[0].mxu0
        %v687 = vadd.f32 0.0, %v686
        %v688 = vpop.f32.mrb[0].mxu0
        %689 = vmatprep.mubr.f32.mxu0 0.0
        %690 = vmatmul.mubr.f32.gmra.mrb[0].mxu0 %v424
        %v691 = vpop.f32.mrb[0].mxu0
        %v692 = vadd.f32 0.0, %v691
        %v693 = vpop.f32.mrb[0].mxu0
        %694 = vmatprep.mubr.f32.mxu0 0.0
        %695 = vmatmul.mubr.f32.gmra.mrb[0].mxu0 %v427
        %v696 = vpop.f32.mrb[0].mxu0
        %v697 = vadd.f32 0.0, %v696
        %v698 = vpop.f32.mrb[0].mxu0
        %699 = vmatprep.mubr.f32.mxu0 0.0
        %700 = vmatmul.mubr.f32.gmra.mrb[0].mxu0 %v430
        %v701 = vpop.f32.mrb[0].mxu0
        %v702 = vadd.f32 0.0, %v701
        %v703 = vpop.f32.mrb[0].mxu0
        %704 = vmatprep.mubr.f32.mxu0 0.0
        %705 = vmatmul.mubr.f32.gmra.mrb[0].mxu0 %v433
        %v706 = vpop.f32.mrb[0].mxu0
        %v707 = vadd.f32 0.0, %v706
        %v708 = vpop.f32.mrb[0].mxu0
        %709 = vmatprep.mubr.f32.mxu0 0.0
        %710 = vmatmul.mubr.f32.gmra.mrb[0].mxu0 %v436
        %v711 = vpop.f32.mrb[0].mxu0
        %v712 = vadd.f32 0.0, %v711
        %v713 = vpop.f32.mrb[0].mxu0
        %714 = vmatprep.mubr.f32.mxu0 0.0
        %715 = vmatmul.mubr.f32.gmra.mrb[0].mxu0 %v439
        %v716 = vpop.f32.mrb[0].mxu0
        %v717 = vadd.f32 0.0, %v716
        %v718 = vpop.f32.mrb[0].mxu0
        %719 = vmatprep.mubr.f32.mxu0 0.0
        %720 = vmatmul.mubr.f32.gmra.mrb[0].mxu0 %v442
        %v721 = vpop.f32.mrb[0].mxu0
        %v722 = vadd.f32 0.0, %v721
        %v723 = vpop.f32.mrb[0].mxu0
        %724 = vmatprep.mubr.f32.mxu0 0.0
        %725 = vmatmul.mubr.f32.gmra.mrb[0].mxu0 %v445
        %v726 = vpop.f32.mrb[0].mxu0
        %v727 = vadd.f32 0.0, %v726
        %v728 = vpop.f32.mrb[0].mxu0
        %729 = vmatprep.mubr.f32.mxu0 0.0
        %730 = vmatmul.mubr.f32.gmra.mrb[0].mxu0 %v448
        %v731 = vpop.f32.mrb[0].mxu0
        %v732 = vadd.f32 0.0, %v731
        %v733 = vpop.f32.mrb[0].mxu0
        %734 = vmatprep.mubr.f32.mxu0 0.0
        %735 = vmatmul.mubr.f32.gmra.mrb[0].mxu0 %v451
        %v736 = vpop.f32.mrb[0].mxu0
        %v737 = vadd.f32 0.0, %v736
        %v738 = vpop.f32.mrb[0].mxu0
        %739 = vmatprep.mubr.f32.mxu0 0.0
        %740 = vmatmul.mubr.f32.gmra.mrb[0].mxu0 %v454
        %v741 = vpop.f32.mrb[0].mxu0
        %v742 = vadd.f32 0.0, %v741
        %v743 = vpop.f32.mrb[0].mxu0
        %744 = vmatprep.mubr.f32.mxu0 0.0
        %745 = vmatmul.mubr.f32.gmra.mrb[0].mxu0 %v457
        %v746 = vpop.f32.mrb[0].mxu0
        %v747 = vadd.f32 0.0, %v746
        %v748 = vpop.f32.mrb[0].mxu0
        %749 = vmatprep.mubr.f32.mxu0 0.0
        %750 = vmatmul.mubr.f32.gmra.mrb[0].mxu0 %v460
        %v751 = vpop.f32.mrb[0].mxu0
        %v752 = vadd.f32 0.0, %v751
        %v753 = vpop.f32.mrb[0].mxu0
        %754 = vmatprep.mubr.f32.mxu0 0.0
        %755 = vmatmul.mubr.f32.gmra.mrb[0].mxu0 %v463
        %v756 = vpop.f32.mrb[0].mxu0
        %v757 = vadd.f32 0.0, %v756
        %v758 = vpop.f32.mrb[0].mxu0
        %759 = vmatprep.mubr.f32.mxu0 0.0
        %760 = vmatmul.mubr.f32.gmra.mrb[0].mxu0 %v466
        %v761 = vpop.f32.mrb[0].mxu0
        %v762 = vadd.f32 0.0, %v761
        %v763 = vpop.f32.mrb[0].mxu0
        %764 = vmatprep.mubr.f32.mxu0 0.0
        %765 = vmatmul.mubr.f32.gmra.mrb[0].mxu0 %v469
        %v766 = vpop.f32.mrb[0].mxu0
        %v767 = vadd.f32 0.0, %v766
        %v768 = vpop.f32.mrb[0].mxu0
        %769 = vmatprep.mubr.f32.mxu0 0.0
        %770 = vmatmul.mubr.f32.gmra.mrb[0].mxu0 %v472
        %v771 = vpop.f32.mrb[0].mxu0
        %v772 = vadd.f32 0.0, %v771
        %v773 = vpop.f32.mrb[0].mxu0
        %774 = vmatprep.mubr.f32.mxu0 0.0
        %775 = vmatmul.mubr.f32.gmra.mrb[0].mxu0 %v475
        %v776 = vpop.f32.mrb[0].mxu0
        %v777 = vadd.f32 0.0, %v776
        %v778 = vpop.f32.mrb[0].mxu0
        %779 = vmatprep.mubr.f32.mxu0 0.0
        %780 = vmatmul.mubr.f32.gmra.mrb[0].mxu0 %v478
        %v781 = vpop.f32.mrb[0].mxu0
        %v782 = vadd.f32 0.0, %v781
        %v783 = vpop.f32.mrb[0].mxu0
        %784 = vdwg.mxu0
        %v785 = vand.u32 2147483647, %v547
        %v786 = vand.u32 2147483647, %v552
        %v787 = vand.u32 2147483647, %v557
        %v788 = vand.u32 2147483647, %v562
        %v789 = vand.u32 2147483647, %v567
        %v790 = vand.u32 2147483647, %v572
        %v791 = vand.u32 2147483647, %v577
        %v792 = vand.u32 2147483647, %v582
        %v793 = vand.u32 2147483647, %v587
        %v794 = vand.u32 2147483647, %v592
        %v795 = vand.u32 2147483647, %v597
        %v796 = vand.u32 2147483647, %v602
        %v797 = vand.u32 2147483647, %v607
        %v798 = vand.u32 2147483647, %v612
        %v799 = vand.u32 2147483647, %v617
        %v800 = vand.u32 2147483647, %v622
        %v801 = vand.u32 2147483647, %v627
        %v802 = vand.u32 2147483647, %v632
        %v803 = vand.u32 2147483647, %v637
        %v804 = vand.u32 2147483647, %v642
        %v805 = vand.u32 2147483647, %v647
        %v806 = vand.u32 2147483647, %v652
        %v807 = vand.u32 2147483647, %v657
        %v808 = vand.u32 2147483647, %v662
        %v809 = vand.u32 2147483647, %v667
        %v810 = vand.u32 2147483647, %v672
        %v811 = vand.u32 2147483647, %v677
        %v812 = vand.u32 2147483647, %v682
        %v813 = vand.u32 2147483647, %v687
        %v814 = vand.u32 2147483647, %v692
        %v815 = vand.u32 2147483647, %v697
        %v816 = vand.u32 2147483647, %v702
        %v817 = vand.u32 2147483647, %v707
        %v818 = vand.u32 2147483647, %v712
        %v819 = vand.u32 2147483647, %v717
        %v820 = vand.u32 2147483647, %v722
        %v821 = vand.u32 2147483647, %v727
        %v822 = vand.u32 2147483647, %v732
        %v823 = vand.u32 2147483647, %v737
        %v824 = vand.u32 2147483647, %v742
        %v825 = vand.u32 2147483647, %v747
        %v826 = vand.u32 2147483647, %v752
        %v827 = vand.u32 2147483647, %v757
        %v828 = vand.u32 2147483647, %v762
        %v829 = vand.u32 2147483647, %v767
        %v830 = vand.u32 2147483647, %v772
        %v831 = vand.u32 2147483647, %v777
        %v832 = vand.u32 2147483647, %v782
        %v833 = vsub.f32 1.0, %v785
        %v834 = vsub.f32 1.0, %v786
        %v835 = vsub.f32 1.0, %v787
        %v836 = vsub.f32 1.0, %v788
        %v837 = vsub.f32 1.0, %v789
        %v838 = vsub.f32 1.0, %v790
        %v839 = vsub.f32 1.0, %v791
        %v840 = vsub.f32 1.0, %v792
        %v841 = vsub.f32 1.0, %v793
        %v842 = vsub.f32 1.0, %v794
        %v843 = vsub.f32 1.0, %v795
        %v844 = vsub.f32 1.0, %v796
        %v845 = vsub.f32 1.0, %v797
        %v846 = vsub.f32 1.0, %v798
        %v847 = vsub.f32 1.0, %v799
        %v848 = vsub.f32 1.0, %v800
        %v849 = vsub.f32 1.0, %v801
        %v850 = vsub.f32 1.0, %v802
        %v851 = vsub.f32 1.0, %v803
        %v852 = vsub.f32 1.0, %v804
        %v853 = vsub.f32 1.0, %v805
        %v854 = vsub.f32 1.0, %v806
        %v855 = vsub.f32 1.0, %v807
        %v856 = vsub.f32 1.0, %v808
        %v857 = vsub.f32 1.0, %v809
        %v858 = vsub.f32 1.0, %v810
        %v859 = vsub.f32 1.0, %v811
        %v860 = vsub.f32 1.0, %v812
        %v861 = vsub.f32 1.0, %v813
        %v862 = vsub.f32 1.0, %v814
        %v863 = vsub.f32 1.0, %v815
        %v864 = vsub.f32 1.0, %v816
        %v865 = vsub.f32 1.0, %v817
        %v866 = vsub.f32 1.0, %v818
        %v867 = vsub.f32 1.0, %v819
        %v868 = vsub.f32 1.0, %v820
        %v869 = vsub.f32 1.0, %v821
        %v870 = vsub.f32 1.0, %v822
        %v871 = vsub.f32 1.0, %v823
        %v872 = vsub.f32 1.0, %v824
        %v873 = vsub.f32 1.0, %v825
        %v874 = vsub.f32 1.0, %v826
        %v875 = vsub.f32 1.0, %v827
        %v876 = vsub.f32 1.0, %v828
        %v877 = vsub.f32 1.0, %v829
        %v878 = vsub.f32 1.0, %v830
        %v879 = vsub.f32 1.0, %v831
        %v880 = vsub.f32 1.0, %v832
        %v881 = vmax.f32 %v833, 0.0
        %v882 = vmax.f32 %v834, 0.0
        %v883 = vmax.f32 %v835, 0.0
        %v884 = vmax.f32 %v836, 0.0
        %v885 = vmax.f32 %v837, 0.0
        %v886 = vmax.f32 %v838, 0.0
        %v887 = vmax.f32 %v839, 0.0
        %v888 = vmax.f32 %v840, 0.0
        %v889 = vmax.f32 %v841, 0.0
        %v890 = vmax.f32 %v842, 0.0
        %v891 = vmax.f32 %v843, 0.0
        %v892 = vmax.f32 %v844, 0.0
        %v893 = vmax.f32 %v845, 0.0
        %v894 = vmax.f32 %v846, 0.0
        %v895 = vmax.f32 %v847, 0.0
        %v896 = vmax.f32 %v848, 0.0
        %v897 = vmax.f32 %v849, 0.0
        %v898 = vmax.f32 %v850, 0.0
        %v899 = vmax.f32 %v851, 0.0
        %v900 = vmax.f32 %v852, 0.0
        %v901 = vmax.f32 %v853, 0.0
        %v902 = vmax.f32 %v854, 0.0
        %v903 = vmax.f32 %v855, 0.0
        %v904 = vmax.f32 %v856, 0.0
        %v905 = vmax.f32 %v857, 0.0
        %v906 = vmax.f32 %v858, 0.0
        %v907 = vmax.f32 %v859, 0.0
        %v908 = vmax.f32 %v860, 0.0
        %v909 = vmax.f32 %v861, 0.0
        %v910 = vmax.f32 %v862, 0.0
        %v911 = vmax.f32 %v863, 0.0
        %v912 = vmax.f32 %v864, 0.0
        %v913 = vmax.f32 %v865, 0.0
        %v914 = vmax.f32 %v866, 0.0
        %v915 = vmax.f32 %v867, 0.0
        %v916 = vmax.f32 %v868, 0.0
        %v917 = vmax.f32 %v869, 0.0
        %v918 = vmax.f32 %v870, 0.0
        %v919 = vmax.f32 %v871, 0.0
        %v920 = vmax.f32 %v872, 0.0
        %v921 = vmax.f32 %v873, 0.0
        %v922 = vmax.f32 %v874, 0.0
        %v923 = vmax.f32 %v875, 0.0
        %v924 = vmax.f32 %v876, 0.0
        %v925 = vmax.f32 %v877, 0.0
        %v926 = vmax.f32 %v878, 0.0
        %v927 = vmax.f32 %v879, 0.0
        %v928 = vmax.f32 %v880, 0.0
        %v929 = vmul.f32 %v881, %v905
        %v930 = vmul.f32 %v882, %v906
        %v931 = vmul.f32 %v883, %v907
        %v932 = vmul.f32 %v884, %v908
        %v933 = vmul.f32 %v885, %v909
        %v934 = vmul.f32 %v886, %v910
        %v935 = vmul.f32 %v887, %v911
        %v936 = vmul.f32 %v888, %v912
        %v937 = vmul.f32 %v889, %v913
        %v938 = vmul.f32 %v890, %v914
        %v939 = vmul.f32 %v891, %v915
        %v940 = vmul.f32 %v892, %v916
        %v941 = vmul.f32 %v893, %v917
        %v942 = vmul.f32 %v894, %v918
        %v943 = vmul.f32 %v895, %v919
        %v944 = vmul.f32 %v896, %v920
        %v945 = vmul.f32 %v897, %v921
        %v946 = vmul.f32 %v898, %v922
        %v947 = vmul.f32 %v899, %v923
        %v948 = vmul.f32 %v900, %v924
        %v949 = vmul.f32 %v901, %v925
        %v950 = vmul.f32 %v902, %v926
        %v951 = vmul.f32 %v903, %v927
        %v952 = vmul.f32 %v904, %v928
        %v953 = vld [vmem:[%s3] sm:$0xff]
        %v954 = vld [vmem:[%s3 + $0x8] sm:$0xff]
        %v955 = vld [vmem:[%s3 + $0x10] sm:$0xff]
        %v956 = vld [vmem:[%s3 + $0x18] sm:$0xff]
        %v957 = vld [vmem:[%s3 + $0x20] sm:$0xff]
        %v958 = vld [vmem:[%s3 + $0x28] sm:$0xff]
        %v959 = vld [vmem:[%s3 + $0x30] sm:$0xff]
        %v960 = vld [vmem:[%s3 + $0x38] sm:$0xff]
        %v961 = vld [vmem:[%s3 + $0x40] sm:$0xff]
        %v962 = vld [vmem:[%s3 + $0x48] sm:$0xff]
        %v963 = vld [vmem:[%s3 + $0x50] sm:$0xff]
        %v964 = vld [vmem:[%s3 + $0x58] sm:$0xff]
        %v965 = vld [vmem:[%s3 + $0x60] sm:$0xff]
        %v966 = vld [vmem:[%s3 + $0x68] sm:$0xff]
        %v967 = vld [vmem:[%s3 + $0x70] sm:$0xff]
        %v968 = vld [vmem:[%s3 + $0x78] sm:$0xff]
        %v969 = vld [vmem:[%s3 + $0x80] sm:$0xff]
        %v970 = vld [vmem:[%s3 + $0x88] sm:$0xff]
        %v971 = vld [vmem:[%s3 + $0x90] sm:$0xff]
        %v972 = vld [vmem:[%s3 + $0x98] sm:$0xff]
        %v973 = vld [vmem:[%s3 + $0xa0] sm:$0xff]
        %v974 = vld [vmem:[%s3 + $0xa8] sm:$0xff]
        %v975 = vld [vmem:[%s3 + $0xb0] sm:$0xff]
        %v976 = vld [vmem:[%s3 + $0xb8] sm:$0xff]
        %v977 = vld [vmem:[%s3 + $0xc0] sm:$0xff]
        %v978 = vld [vmem:[%s3 + $0xc8] sm:$0xff]
        %v979 = vld [vmem:[%s3 + $0xd0] sm:$0xff]
        %v980 = vld [vmem:[%s3 + $0xd8] sm:$0xff]
        %v981 = vld [vmem:[%s3 + $0xe0] sm:$0xff]
        %v982 = vld [vmem:[%s3 + $0xe8] sm:$0xff]
        %v983 = vld [vmem:[%s3 + $0xf0] sm:$0xff]
        %v984 = vld [vmem:[%s3 + $0xf8] sm:$0xff]
        %v985 = vld [vmem:[%s3 + $0x100] sm:$0xff]
        %v986 = vld [vmem:[%s3 + $0x108] sm:$0xff]
        %v987 = vld [vmem:[%s3 + $0x110] sm:$0xff]
        %v988 = vld [vmem:[%s3 + $0x118] sm:$0xff]
        %v989 = vld [vmem:[%s3 + $0x120] sm:$0xff]
        %v990 = vld [vmem:[%s3 + $0x128] sm:$0xff]
        %v991 = vld [vmem:[%s3 + $0x130] sm:$0xff]
        %v992 = vld [vmem:[%s3 + $0x138] sm:$0xff]
        %v993 = vld [vmem:[%s3 + $0x140] sm:$0xff]
        %v994 = vld [vmem:[%s3 + $0x148] sm:$0xff]
        %v995 = vld [vmem:[%s3 + $0x150] sm:$0xff]
        %v996 = vld [vmem:[%s3 + $0x158] sm:$0xff]
        %v997 = vld [vmem:[%s3 + $0x160] sm:$0xff]
        %v998 = vld [vmem:[%s3 + $0x168] sm:$0xff]
        %v999 = vld [vmem:[%s3 + $0x170] sm:$0xff]
        %v1000 = vld [vmem:[%s3 + $0x178] sm:$0xff]
        %vm1001 = vcmask 523264
        %v1003 = vsel %vm1001, %v954, 0
        %v1006 = vsel %vm1001, %v956, 0
        %v1009 = vsel %vm1001, %v958, 0
        %v1012 = vsel %vm1001, %v960, 0
        %v1015 = vsel %vm1001, %v962, 0
        %v1018 = vsel %vm1001, %v964, 0
        %v1021 = vsel %vm1001, %v966, 0
        %v1024 = vsel %vm1001, %v968, 0
        %v1027 = vsel %vm1001, %v970, 0
        %v1030 = vsel %vm1001, %v972, 0
        %v1033 = vsel %vm1001, %v974, 0
        %v1036 = vsel %vm1001, %v976, 0
        %v1039 = vsel %vm1001, %v978, 0
        %v1042 = vsel %vm1001, %v980, 0
        %v1045 = vsel %vm1001, %v982, 0
        %v1048 = vsel %vm1001, %v984, 0
        %v1051 = vsel %vm1001, %v986, 0
        %v1054 = vsel %vm1001, %v988, 0
        %v1057 = vsel %vm1001, %v990, 0
        %v1060 = vsel %vm1001, %v992, 0
        %v1063 = vsel %vm1001, %v994, 0
        %v1066 = vsel %vm1001, %v996, 0
        %v1069 = vsel %vm1001, %v998, 0
        %v1072 = vsel %vm1001, %v1000, 0
        %1074 = vmatprep.subr.mxu0 0.0
        %1075 = vmatpush1.msra.mxu0 %v929
        %1076 = vmatprep.subr.mxu0 0.0
        %1077 = vmatpush1.msra.mxu0 %v930
        %1078 = vmatprep.subr.mxu0 0.0
        %1079 = vmatpush1.msra.mxu0 %v931
        %1080 = vmatprep.subr.mxu0 0.0
        %1081 = vmatpush1.msra.mxu0 %v932
        %1082 = vmatprep.subr.mxu0 0.0
        %1083 = vmatpush1.msra.mxu0 %v933
        %1084 = vmatprep.subr.mxu0 0.0
        %1085 = vmatpush1.msra.mxu0 %v934
        %1086 = vmatprep.subr.mxu0 0.0
        %1087 = vmatpush1.msra.mxu0 %v935
        %1088 = vmatprep.subr.mxu0 0.0
        %1089 = vmatpush1.msra.mxu0 %v936
        %1090 = vmatprep.subr.mxu0 0.0
        %1091 = vmatpush1.msra.mxu0 %v937
        %1092 = vmatprep.subr.mxu0 0.0
        %1093 = vmatpush1.msra.mxu0 %v938
        %1094 = vmatprep.subr.mxu0 0.0
        %1095 = vmatpush1.msra.mxu0 %v939
        %1096 = vmatprep.subr.mxu0 0.0
        %1097 = vmatpush1.msra.mxu0 %v940
        %1098 = vmatprep.subr.mxu0 0.0
        %1099 = vmatpush1.msra.mxu0 %v941
        %1100 = vmatprep.subr.mxu0 0.0
        %1101 = vmatpush1.msra.mxu0 %v942
        %1102 = vmatprep.subr.mxu0 0.0
        %1103 = vmatpush1.msra.mxu0 %v943
        %1104 = vmatprep.subr.mxu0 0.0
        %1105 = vmatpush1.msra.mxu0 %v944
        %1106 = vmatprep.subr.mxu0 0.0
        %1107 = vmatpush1.msra.mxu0 %v945
        %1108 = vmatprep.subr.mxu0 0.0
        %1109 = vmatpush1.msra.mxu0 %v946
        %1110 = vmatprep.subr.mxu0 0.0
        %1111 = vmatpush1.msra.mxu0 %v947
        %1112 = vmatprep.subr.mxu0 0.0
        %1113 = vmatpush1.msra.mxu0 %v948
        %1114 = vmatprep.subr.mxu0 0.0
        %1115 = vmatpush1.msra.mxu0 %v949
        %1116 = vmatprep.subr.mxu0 0.0
        %1117 = vmatpush1.msra.mxu0 %v950
        %1118 = vmatprep.subr.mxu0 0.0
        %1119 = vmatpush1.msra.mxu0 %v951
        %1120 = vmatprep.subr.mxu0 0.0
        %1121 = vmatpush1.msra.mxu0 %v952
        %1122 = vmatprep.subr.mxu0 0.0
        %1123 = vmatpush1.msra.mxu0 0.0
        %1124 = vmatprep.subr.mxu0 0.0
        %1125 = vmatpush1.msra.mxu0 0.0
        %1126 = vmatprep.subr.mxu0 0.0
        %1127 = vmatpush1.msra.mxu0 0.0
        %1128 = vmatprep.subr.mxu0 0.0
        %1129 = vmatpush1.msra.mxu0 0.0
        %1130 = vmatprep.subr.mxu0 0.0
        %1131 = vmatpush1.msra.mxu0 0.0
        %1132 = vmatprep.subr.mxu0 0.0
        %1133 = vmatpush1.msra.mxu0 0.0
        %1134 = vmatprep.subr.mxu0 0.0
        %1135 = vmatpush1.msra.mxu0 0.0
        %1136 = vmatprep.subr.mxu0 0.0
        %1137 = vmatpush1.msra.mxu0 0.0
        %1138 = vmatprep.mubr.f32.mxu0 %v1003
        %1139 = vmatmul.mubr.f32.gmra.mrb[0].mxu0 %v953
        %v1140 = vpop.f32.mrb[0].mxu0
        %v1141 = vadd.f32 0.0, %v1140
        %v1142 = vpop.f32.mrb[0].mxu0
        %1143 = vmatprep.mubr.f32.mxu0 %v1006
        %1144 = vmatmul.mubr.f32.gmra.mrb[0].mxu0 %v955
        %v1145 = vpop.f32.mrb[0].mxu0
        %v1146 = vadd.f32 0.0, %v1145
        %v1147 = vpop.f32.mrb[0].mxu0
        %1148 = vmatprep.mubr.f32.mxu0 %v1009
        %1149 = vmatmul.mubr.f32.gmra.mrb[0].mxu0 %v957
        %v1150 = vpop.f32.mrb[0].mxu0
        %v1151 = vadd.f32 0.0, %v1150
        %v1152 = vpop.f32.mrb[0].mxu0
        %1153 = vmatprep.mubr.f32.mxu0 %v1012
        %1154 = vmatmul.mubr.f32.gmra.mrb[0].mxu0 %v959
        %v1155 = vpop.f32.mrb[0].mxu0
        %v1156 = vadd.f32 0.0, %v1155
        %v1157 = vpop.f32.mrb[0].mxu0
        %1158 = vmatprep.mubr.f32.mxu0 %v1015
        %1159 = vmatmul.mubr.f32.gmra.mrb[0].mxu0 %v961
        %v1160 = vpop.f32.mrb[0].mxu0
        %v1161 = vadd.f32 0.0, %v1160
        %v1162 = vpop.f32.mrb[0].mxu0
        %1163 = vmatprep.mubr.f32.mxu0 %v1018
        %1164 = vmatmul.mubr.f32.gmra.mrb[0].mxu0 %v963
        %v1165 = vpop.f32.mrb[0].mxu0
        %v1166 = vadd.f32 0.0, %v1165
        %v1167 = vpop.f32.mrb[0].mxu0
        %1168 = vmatprep.mubr.f32.mxu0 %v1021
        %1169 = vmatmul.mubr.f32.gmra.mrb[0].mxu0 %v965
        %v1170 = vpop.f32.mrb[0].mxu0
        %v1171 = vadd.f32 0.0, %v1170
        %v1172 = vpop.f32.mrb[0].mxu0
        %1173 = vmatprep.mubr.f32.mxu0 %v1024
        %1174 = vmatmul.mubr.f32.gmra.mrb[0].mxu0 %v967
        %v1175 = vpop.f32.mrb[0].mxu0
        %v1176 = vadd.f32 0.0, %v1175
        %v1177 = vpop.f32.mrb[0].mxu0
        %1178 = vmatprep.mubr.f32.mxu0 %v1027
        %1179 = vmatmul.mubr.f32.gmra.mrb[0].mxu0 %v969
        %v1180 = vpop.f32.mrb[0].mxu0
        %v1181 = vadd.f32 0.0, %v1180
        %v1182 = vpop.f32.mrb[0].mxu0
        %1183 = vmatprep.mubr.f32.mxu0 %v1030
        %1184 = vmatmul.mubr.f32.gmra.mrb[0].mxu0 %v971
        %v1185 = vpop.f32.mrb[0].mxu0
        %v1186 = vadd.f32 0.0, %v1185
        %v1187 = vpop.f32.mrb[0].mxu0
        %1188 = vmatprep.mubr.f32.mxu0 %v1033
        %1189 = vmatmul.mubr.f32.gmra.mrb[0].mxu0 %v973
        %v1190 = vpop.f32.mrb[0].mxu0
        %v1191 = vadd.f32 0.0, %v1190
        %v1192 = vpop.f32.mrb[0].mxu0
        %1193 = vmatprep.mubr.f32.mxu0 %v1036
        %1194 = vmatmul.mubr.f32.gmra.mrb[0].mxu0 %v975
        %v1195 = vpop.f32.mrb[0].mxu0
        %v1196 = vadd.f32 0.0, %v1195
        %v1197 = vpop.f32.mrb[0].mxu0
        %1198 = vmatprep.mubr.f32.mxu0 %v1039
        %1199 = vmatmul.mubr.f32.gmra.mrb[0].mxu0 %v977
        %v1200 = vpop.f32.mrb[0].mxu0
        %v1201 = vadd.f32 0.0, %v1200
        %v1202 = vpop.f32.mrb[0].mxu0
        %1203 = vmatprep.mubr.f32.mxu0 %v1042
        %1204 = vmatmul.mubr.f32.gmra.mrb[0].mxu0 %v979
        %v1205 = vpop.f32.mrb[0].mxu0
        %v1206 = vadd.f32 0.0, %v1205
        %v1207 = vpop.f32.mrb[0].mxu0
        %1208 = vmatprep.mubr.f32.mxu0 %v1045
        %1209 = vmatmul.mubr.f32.gmra.mrb[0].mxu0 %v981
        %v1210 = vpop.f32.mrb[0].mxu0
        %v1211 = vadd.f32 0.0, %v1210
        %v1212 = vpop.f32.mrb[0].mxu0
        %1213 = vmatprep.mubr.f32.mxu0 %v1048
        %1214 = vmatmul.mubr.f32.gmra.mrb[0].mxu0 %v983
        %v1215 = vpop.f32.mrb[0].mxu0
        %v1216 = vadd.f32 0.0, %v1215
        %v1217 = vpop.f32.mrb[0].mxu0
        %1218 = vmatprep.mubr.f32.mxu0 %v1051
        %1219 = vmatmul.mubr.f32.gmra.mrb[0].mxu0 %v985
        %v1220 = vpop.f32.mrb[0].mxu0
        %v1221 = vadd.f32 0.0, %v1220
        %v1222 = vpop.f32.mrb[0].mxu0
        %1223 = vmatprep.mubr.f32.mxu0 %v1054
        %1224 = vmatmul.mubr.f32.gmra.mrb[0].mxu0 %v987
        %v1225 = vpop.f32.mrb[0].mxu0
        %v1226 = vadd.f32 0.0, %v1225
        %v1227 = vpop.f32.mrb[0].mxu0
        %1228 = vmatprep.mubr.f32.mxu0 %v1057
        %1229 = vmatmul.mubr.f32.gmra.mrb[0].mxu0 %v989
        %v1230 = vpop.f32.mrb[0].mxu0
        %v1231 = vadd.f32 0.0, %v1230
        %v1232 = vpop.f32.mrb[0].mxu0
        %1233 = vmatprep.mubr.f32.mxu0 %v1060
        %1234 = vmatmul.mubr.f32.gmra.mrb[0].mxu0 %v991
        %v1235 = vpop.f32.mrb[0].mxu0
        %v1236 = vadd.f32 0.0, %v1235
        %v1237 = vpop.f32.mrb[0].mxu0
        %1238 = vmatprep.mubr.f32.mxu0 %v1063
        %1239 = vmatmul.mubr.f32.gmra.mrb[0].mxu0 %v993
        %v1240 = vpop.f32.mrb[0].mxu0
        %v1241 = vadd.f32 0.0, %v1240
        %v1242 = vpop.f32.mrb[0].mxu0
        %1243 = vmatprep.mubr.f32.mxu0 %v1066
        %1244 = vmatmul.mubr.f32.gmra.mrb[0].mxu0 %v995
        %v1245 = vpop.f32.mrb[0].mxu0
        %v1246 = vadd.f32 0.0, %v1245
        %v1247 = vpop.f32.mrb[0].mxu0
        %1248 = vmatprep.mubr.f32.mxu0 %v1069
        %1249 = vmatmul.mubr.f32.gmra.mrb[0].mxu0 %v997
        %v1250 = vpop.f32.mrb[0].mxu0
        %v1251 = vadd.f32 0.0, %v1250
        %v1252 = vpop.f32.mrb[0].mxu0
        %1253 = vmatprep.mubr.f32.mxu0 %v1072
        %1254 = vmatmul.mubr.f32.gmra.mrb[0].mxu0 %v999
        %v1255 = vpop.f32.mrb[0].mxu0
        %v1256 = vadd.f32 0.0, %v1255
        %v1257 = vpop.f32.mrb[0].mxu0
        %1258 = vdwg.mxu0
        %v1259 = vmax.f32 %v1201, %v1221
        %v1260 = vmax.f32 %v1206, %v1226
        %v1261 = vmax.f32 %v1211, %v1231
        %v1262 = vmax.f32 %v1216, %v1236
        %v1263 = vmax.f32 %v1259, %v1241
        %v1264 = vmax.f32 %v1260, %v1246
        %v1265 = vmax.f32 %v1261, %v1251
        %v1266 = vmax.f32 %v1262, %v1256
        %v1267 = vsub.f32 %v1201, %v1263
        %v1268 = vsub.f32 %v1206, %v1264
        %v1269 = vsub.f32 %v1211, %v1265
        %v1270 = vsub.f32 %v1216, %v1266
        %v1271 = vmul.f32 %v1267, 1.442695
        %v1272 = vpow.pop %v1271
        %v1273 = vmul.f32 %v1268, 1.442695
        %v1274 = vpow.pop %v1273
        %v1275 = vmul.f32 %v1269, 1.442695
        %v1276 = vpow.pop %v1275
        %v1277 = vmul.f32 %v1270, 1.442695
        %v1278 = vpow.pop %v1277
        %v1279 = vmul.f32 %v1272, %v1141
        %v1280 = vmul.f32 %v1274, %v1146
        %v1281 = vmul.f32 %v1276, %v1151
        %v1282 = vmul.f32 %v1278, %v1156
        %v1283 = vsub.f32 %v1221, %v1263
        %v1284 = vsub.f32 %v1226, %v1264
        %v1285 = vsub.f32 %v1231, %v1265
        %v1286 = vsub.f32 %v1236, %v1266
        %v1287 = vmul.f32 %v1283, 1.442695
        %v1288 = vpow.pop %v1287
        %v1289 = vmul.f32 %v1284, 1.442695
        %v1290 = vpow.pop %v1289
        %v1291 = vmul.f32 %v1285, 1.442695
        %v1292 = vpow.pop %v1291
        %v1293 = vmul.f32 %v1286, 1.442695
        %v1294 = vpow.pop %v1293
        %v1295 = vmul.f32 %v1288, %v1161
        %v1296 = vmul.f32 %v1290, %v1166
        %v1297 = vmul.f32 %v1292, %v1171
        %v1298 = vmul.f32 %v1294, %v1176
        %v1299 = vadd.f32 %v1279, %v1295
        %v1300 = vadd.f32 %v1280, %v1296
        %v1301 = vadd.f32 %v1281, %v1297
        %v1302 = vadd.f32 %v1282, %v1298
        %v1303 = vadd.f32 %v1272, %v1288
        %v1304 = vadd.f32 %v1274, %v1290
        %v1305 = vadd.f32 %v1276, %v1292
        %v1306 = vadd.f32 %v1278, %v1294
        %v1307 = vsub.f32 %v1241, %v1263
        %v1308 = vsub.f32 %v1246, %v1264
        %v1309 = vsub.f32 %v1251, %v1265
        %v1310 = vsub.f32 %v1256, %v1266
        %v1311 = vmul.f32 %v1307, 1.442695
        %v1312 = vpow.pop %v1311
        %v1313 = vmul.f32 %v1308, 1.442695
        %v1314 = vpow.pop %v1313
        %v1315 = vmul.f32 %v1309, 1.442695
        %v1316 = vpow.pop %v1315
        %v1317 = vmul.f32 %v1310, 1.442695
        %v1318 = vpow.pop %v1317
        %v1319 = vmul.f32 %v1312, %v1181
        %v1320 = vmul.f32 %v1314, %v1186
        %v1321 = vmul.f32 %v1316, %v1191
        %v1322 = vmul.f32 %v1318, %v1196
        %v1323 = vadd.f32 %v1299, %v1319
        %v1324 = vadd.f32 %v1300, %v1320
        %v1325 = vadd.f32 %v1301, %v1321
        %v1326 = vadd.f32 %v1302, %v1322
        %v1327 = vadd.f32 %v1303, %v1312
        %v1328 = vadd.f32 %v1304, %v1314
        %v1329 = vadd.f32 %v1305, %v1316
        %v1330 = vadd.f32 %v1306, %v1318
        %v1331 = vrcp.pop %v1327
        %v1332 = vmul.f32 %v1323, %v1331
        %v1333 = vrcp.pop %v1328
        %v1334 = vmul.f32 %v1324, %v1333
        %v1335 = vrcp.pop %v1329
        %v1336 = vmul.f32 %v1325, %v1335
        %v1337 = vrcp.pop %v1330
        %v1338 = vmul.f32 %v1326, %v1337
        %1339 = vst [vmem:[%s188] sm:$0xff] %v1332
        %1340 = vst [vmem:[%s188 + $0x8] sm:$0xff] %v1334
        %1341 = vst [vmem:[%s188 + $0x10] sm:$0xff] %v1336
        %1342 = vst [vmem:[%s188 + $0x18] sm:$0xff] %v1338
        %s1343 = sand.u32 %s115, 1
        %s1344 = scalar_lea.sflag [#allocation3], %s1343
        %s1345 = sand.u32 %s115, 1
        %s1346 = smul.addr %s1345, 32
        %s1347 = scalar_lea.vmem [#allocation2], %s1346
        // Predicated region
        $region37: #{_encode.1} parent=35 // pred_check
          %p1348 = pneg %p125
        $region38: #{_encode.1} parent=35 // pred_check_branch
          %1350 = sbr.rel (%p1348) target = $region40
        $region39: #{_encode.1} parent=35 // pred_region
          %s1352 = ssub.s32 512, 512
          %1353 = vsyncadd %s1344, %s1352
          %s1354 = smul.addr %s18, 128
          %s1355 = scalar_lea.hbm %s4, %s1354
          %s1356 = sshll.u32 %s1347, 4
          %s1357 = int_to_ptr.vmem [resolvable:$true] %s1356
          %1362 = dma.vmem_to_hbm [thread:$0]  %s1357, 512, %s1355, %s1344, 128, 256, 8
        $region40: #{_encode.1} parent=35 // pred_fallthru
          _
      $region36: #{_encode.1} parent=5 // pred_fallthru
        _
      %p1363 = scmp.le.s32.totalorder 2, %s13
      // Predicated region
      $region41: #{_encode.1} parent=5 // pred_check
        %p1364 = pneg %p1363
      $region42: #{_encode.1} parent=5 // pred_check_branch
        %1366 = sbr.rel (%p1364) target = $region44
      $region43: #{_encode.1} parent=5 // pred_region
        %s1367 = ssub.s32 %s13, 2
        // Predicated region
        $region45: #{_encode.1} parent=43 // pred_check
          %p1368 = pneg %p131
        $region46: #{_encode.1} parent=43 // pred_check_branch
          %1370 = sbr.rel (%p1368) target = $region48
        $region47: #{_encode.1} parent=43 // pred_region
          %s1371 = sand.u32 %s116, 1
          %s1372 = scalar_lea.sflag [#allocation3], %s1371
          %s1373 = sand.u32 %s116, 1
          %s1374 = smul.addr %s1373, 32
          %s1375 = scalar_lea.vmem [#allocation2], %s1374
          %1376 = dma.done %s1372, 512
        $region48: #{_encode.1} parent=43 // pred_fallthru
          _
      $region44: #{_encode.1} parent=5 // pred_fallthru
        _
    $region6: #{_encode.1} parent=1 // loop_footer
      %s17 = sadd.s32 1, %s13
    $region7: #{_encode.1} parent=1 // loop_footer_branch
      %12 = sbr.rel target = $region3
    $region8: #{_encode.1} parent=1 // loop_exit
      _
    %1377 = vsyncpa [#allocation3], 1
    %s1378 = scalar_lea.sflag [#allocation3], 1
    %1379 = vsyncpa %s1378, 1

</llo_original>
